<compile_context>
chip_gen: v6e
topology: v6e:2x2x1
jax: 0.10.0
libtpu: 0.0.40
codegen_flags: <defaults>
</compile_context>

<pallas_src>
import jax
import jax.numpy as jnp
from jax.experimental import pallas as pl
from jax.experimental.pallas import tpu as pltpu


def _matmul_xwT_kernel(x_ref, w_ref, o_ref, acc_ref):
    """One (tm, tn) logits tile: acc += x_tile @ w_tile.T over the K grid axis.

    x_ref:   (tm, tk)  activations (streamed on the inner M axis)
    w_ref:   (tn, tk)  embedding-weight rows (resident across the inner M sweep)
    o_ref:   (tm, tn)  logits tile (written on the last K step)
    acc_ref: (tm, tn)  f32 accumulator scratch
    """
    k = pl.program_id(2)
    prod = jax.lax.dot_general(
        x_ref[...], w_ref[...],
        dimension_numbers=(((1,), (1,)), ((), ())),   # contract last dims: x @ W.T
        preferred_element_type=jnp.float32,
    )

    @pl.when(k == 0)
    def _():
        acc_ref[...] = prod

    @pl.when(k > 0)
    def _():
        acc_ref[...] += prod

    @pl.when(k == pl.num_programs(2) - 1)
    def _():
        o_ref[...] = acc_ref[...].astype(o_ref.dtype)


def _round_up(x, m):
    return ((x + m - 1) // m) * m


def _default_vmem_limit_bytes():
    """Generation-aware VMEM budget (~80% of physical; 64 MiB fallback)."""
    cap = None
    try:
        info_fn = getattr(pltpu, "get_tpu_info", None)
        if info_fn is not None:
            cap = getattr(info_fn(), "vmem_capacity_bytes", None)
    except Exception:
        cap = None
    if not cap:
        return 64 * 1024 * 1024
    return max(32 * 1024 * 1024, min(int(cap * 0.8), 110 * 1024 * 1024))


def _block_bytes(tm, tn, tk, compute_bytes, out_bytes):
    # double-buffered x & W blocks + double-buffered output block + f32 acc scratch
    return (2 * (tm + tn) * tk * compute_bytes
            + 2 * tm * tn * out_bytes
            + tm * tn * 4)


def shared_embedding_output_layer(
    x,
    emb_weight,
    *,
    tm=256,                 # streamed activation row tile
    tn=1024,                # resident embedding-weight (vocab) tile
    compute_dtype=jnp.bfloat16,
    out_dtype=None,
    vmem_limit_bytes=None,
):
    """Pallas implementation of F.linear(x, weight=emb_weight, bias=None).

    x:          (batch, seq, hidden)
    emb_weight: (vocab, hidden)   (torch.nn.Embedding.weight convention)
    returns:    (batch, seq, vocab)
    """
    B, S, D = x.shape
    V, D2 = emb_weight.shape
    assert D == D2, "hidden size mismatch between x and embedding weight"
    M = B * S

    out_dtype = x.dtype if out_dtype is None else out_dtype
    if compute_dtype is None:
        compute_dtype = x.dtype
    if vmem_limit_bytes is None:
        vmem_limit_bytes = _default_vmem_limit_bytes()

    cb = jnp.dtype(compute_dtype).itemsize
    ob = jnp.dtype(out_dtype).itemsize

    # ---- Tile selection --------------------------------------------------
    # Streamed M tile (clamped for tiny problems; stays sublane-aligned).
    tm = max(8, min(tm, _round_up(M, 8)))

    # Resident vocab tile: prefer a 128-aligned tile that DIVIDES V so the big
    # weight never needs padding or copying; pad only for odd vocab sizes.
    tn_target = max(128, min(tn, _round_up(V, 128)))
    tn_sel = None
    if V % 128 == 0:
        cand = (tn_target // 128) * 128
        while cand >= 128:
            if V % cand == 0:
                tn_sel = cand
                break
            cand -= 128
    if tn_sel is None:
        # TODO(synk): odd vocab size -> weight must be padded (extra HBM copy per call).
        tn_sel = tn_target
    tn = tn_sel
    V_pad = _round_up(V, tn)

    # Hidden (K) tile: keep the full hidden dim in one block when it fits the
    # VMEM budget (then the weight tile stays VMEM-resident across the whole
    # inner M sweep and is streamed from HBM exactly once); otherwise K-split
    # with the f32 accumulator so the block footprint is decoupled from D
    # (needed for roofline-sized tiles within v7x's 64 MiB per-TC VMEM).
    budget = int(vmem_limit_bytes * 0.85)
    tk = D
    if _block_bytes(tm, tn, tk, cb, ob) > budget:
        for cand in (2048, 1024, 512, 256, 128):
            if D % cand == 0 and _block_bytes(tm, tn, cand, cb, ob) <= budget:
                tk = cand
                break
        # If D has no 128-aligned divisor that fits, fall through with tk == D
        # (realistic hidden sizes are multiples of 128).

    M_pad = _round_up(M, tm)

    # ---- Operand prep (bf16 MXU operands; only x/M is ever padded in the
    # common case) -----------------------------------------------------------
    x2d = x.reshape(M, D)
    if x2d.dtype != compute_dtype:
        x2d = x2d.astype(compute_dtype)
    if M_pad != M:
        x2d = jnp.pad(x2d, ((0, M_pad - M), (0, 0)))

    w = emb_weight
    if w.dtype != compute_dtype:
        # Free when the caller already stores the embedding weight in bf16.
        w = w.astype(compute_dtype)
    if V_pad != V:
        w = jnp.pad(w, ((0, V_pad - V), (0, 0)))

    n_v = V_pad // tn
    n_m = M_pad // tm
    n_k = D // tk if (D % tk == 0) else 1

    # ---- Cost estimate ----------------------------------------------------
    w_stream = V_pad * D * cb * (1 if n_k == 1 else n_m)  # resident when n_k==1
    x_stream = M_pad * D * cb * n_v
    cost = pl.CostEstimate(
        flops=2 * M_pad * V_pad * D,
        bytes_accessed=w_stream + x_stream + M_pad * V_pad * ob,
        transcendentals=0,
    )

    out2d = pl.pallas_call(
        _matmul_xwT_kernel,
        out_shape=jax.ShapeDtypeStruct((M_pad, V_pad), out_dtype),
        grid_spec=pltpu.PrefetchScalarGridSpec(
            num_scalar_prefetch=0,
            # vocab outermost (resident weight, megacore splits the weight
            # stream), M streamed in the middle, K (reduction) innermost.
            grid=(n_v, n_m, n_k),
            in_specs=[
                pl.BlockSpec((tm, tk), lambda j, i, k: (i, k)),   # x (streamed)
                pl.BlockSpec((tn, tk), lambda j, i, k: (j, k)),   # W rows (resident per j)
            ],
            out_specs=pl.BlockSpec((tm, tn), lambda j, i, k: (i, j)),
            scratch_shapes=[pltpu.VMEM((tm, tn), jnp.float32)],
        ),
        compiler_params=pltpu.CompilerParams(
            dimension_semantics=("parallel", "parallel", "arbitrary"),
            vmem_limit_bytes=vmem_limit_bytes,
        ),
        cost_estimate=cost,
    )(x2d, w)

    if M_pad != M or V_pad != V:
        out2d = out2d[:M, :V]
    return out2d.reshape(B, S, V)


# TODO(synk): the bias=True branch of the torch module calls xavier_uniform_ on a
# 1-D tensor (which errors in PyTorch itself); only the default bias=False path
# is implemented.

if __name__ == "__main__":
    key = jax.random.PRNGKey(0)
    k_x, k_w = jax.random.split(key)

    batch, seq, hidden, vocab = 2, 8, 32, 256

    # Deterministic "embedding layer" weight (vocab, hidden), as nn.Embedding would own.
    emb_weight = jax.random.normal(k_w, (vocab, hidden), dtype=jnp.float32) * 0.02
    # Hidden-state input to the shared output layer.
    x = jax.random.normal(k_x, (batch, seq, hidden), dtype=jnp.float32)

    logits = shared_embedding_output_layer(x, emb_weight)
    logits = jax.block_until_ready(logits)

    assert logits.shape == (batch, seq, vocab)
    assert logits.dtype == x.dtype

    # Reference: F.linear with the same bf16 operand rounding (f32 accumulation).
    xb = x.astype(jnp.bfloat16).astype(jnp.float32)
    wb = emb_weight.astype(jnp.bfloat16).astype(jnp.float32)
    ref = jnp.einsum("bsd,vd->bsv", xb, wb)
    assert jnp.allclose(logits, ref, atol=2e-3, rtol=2e-3)

    print("KERNEL_OK")
</pallas_src>

<mosaic_0001>
module attributes {stable_mosaic.version = 11 : i64} {
  func.func @_matmul_xwT_kernel(%arg0: i32, %arg1: i32, %arg2: i32, %arg3: memref<16x32xbf16, #tpu.memory_space<vmem>>, %arg4: memref<256x32xbf16, #tpu.memory_space<vmem>>, %arg5: memref<16x256xf32, #tpu.memory_space<vmem>>, %arg6: memref<16x256xf32, #tpu.memory_space<vmem>>) attributes {dimension_semantics = [#tpu.dimension_semantics<parallel>, #tpu.dimension_semantics<parallel>, #tpu.dimension_semantics<arbitrary>], iteration_bounds = array<i64: 1, 1, 1>, scalar_prefetch = 0 : i64, scratch_operands = 1 : i64, tpu.core_type = #tpu.core_type<tc>, window_params = [{transform_indices = @transform_0, window_bounds = array<i64: 16, 32>}, {transform_indices = @transform_1, window_bounds = array<i64: 256, 32>}, {transform_indices = @transform_2, window_bounds = array<i64: 16, 256>}]} {
    %c0 = arith.constant 0 : index
    %c0_0 = arith.constant 0 : index
    %0 = vector.load %arg3[%c0, %c0_0] : memref<16x32xbf16, #tpu.memory_space<vmem>>, vector<16x32xbf16>
    %c0_1 = arith.constant 0 : index
    %c0_2 = arith.constant 0 : index
    %1 = vector.load %arg4[%c0_1, %c0_2] : memref<256x32xbf16, #tpu.memory_space<vmem>>, vector<256x32xbf16>
    %cst = arith.constant dense<0.000000e+00> : vector<16x256xf32>
    %2 = tpu.matmul %0, %1, %cst {dimension_numbers = #tpu.dot_dimension_numbers<[1], [1], [0], [0], [0, 0, 1, 0], [], []>} : vector<16x32xbf16>, vector<256x32xbf16>, vector<16x256xf32> -> vector<16x256xf32>
    %c0_i32 = arith.constant 0 : i32
    %3 = arith.cmpi eq, %arg2, %c0_i32 : i32
    %4 = arith.extui %3 : i1 to i32
    %c0_i32_3 = arith.constant 0 : i32
    %5 = arith.cmpi ne, %4, %c0_i32_3 : i32
    scf.if %5 {
      %c0_8 = arith.constant 0 : index
      %c0_9 = arith.constant 0 : index
      %12 = vector.load %arg6[%c0_8, %c0_9] : memref<16x256xf32, #tpu.memory_space<vmem>>, vector<16x256xf32>
      tpu.vector_store %arg6[%c0_8, %c0_9], %2 {strides = array<i32>} : memref<16x256xf32, #tpu.memory_space<vmem>>, vector<16x256xf32>,
    } else {
    }
    %c0_i32_4 = arith.constant 0 : i32
    %6 = arith.cmpi sgt, %arg2, %c0_i32_4 : i32
    %7 = arith.extui %6 : i1 to i32
    %c0_i32_5 = arith.constant 0 : i32
    %8 = arith.cmpi ne, %7, %c0_i32_5 : i32
    scf.if %8 {
      %c0_8 = arith.constant 0 : index
      %c0_9 = arith.constant 0 : index
      %12 = vector.load %arg6[%c0_8, %c0_9] : memref<16x256xf32, #tpu.memory_space<vmem>>, vector<16x256xf32>
      %13 = arith.addf %12, %2 : vector<16x256xf32>
      %c0_10 = arith.constant 0 : index
      %c0_11 = arith.constant 0 : index
      %14 = vector.load %arg6[%c0_10, %c0_11] : memref<16x256xf32, #tpu.memory_space<vmem>>, vector<16x256xf32>
      tpu.vector_store %arg6[%c0_10, %c0_11], %13 {strides = array<i32>} : memref<16x256xf32, #tpu.memory_space<vmem>>, vector<16x256xf32>,
    } else {
    }
    %c0_i32_6 = arith.constant 0 : i32
    %9 = arith.cmpi eq, %arg2, %c0_i32_6 : i32
    %10 = arith.extui %9 : i1 to i32
    %c0_i32_7 = arith.constant 0 : i32
    %11 = arith.cmpi ne, %10, %c0_i32_7 : i32
    scf.if %11 {
      %c0_8 = arith.constant 0 : index
      %c0_9 = arith.constant 0 : index
      %12 = vector.load %arg6[%c0_8, %c0_9] : memref<16x256xf32, #tpu.memory_space<vmem>>, vector<16x256xf32>
      %c0_10 = arith.constant 0 : index
      %c0_11 = arith.constant 0 : index
      %13 = vector.load %arg5[%c0_10, %c0_11] : memref<16x256xf32, #tpu.memory_space<vmem>>, vector<16x256xf32>
      tpu.vector_store %arg5[%c0_10, %c0_11], %12 {strides = array<i32>} : memref<16x256xf32, #tpu.memory_space<vmem>>, vector<16x256xf32>,
    } else {
    }
    return
  }
  func.func @transform_0(%arg0: i32, %arg1: i32, %arg2: i32) -> (i32, i32) {
    %c0_i32 = arith.constant 0 : i32
    return %arg1, %arg2 : i32, i32
  }
  func.func @transform_1(%arg0: i32, %arg1: i32, %arg2: i32) -> (i32, i32) {
    %c0_i32 = arith.constant 0 : i32
    return %arg0, %arg2 : i32, i32
  }
  func.func @transform_2(%arg0: i32, %arg1: i32, %arg2: i32) -> (i32, i32) {
    %c0_i32 = arith.constant 0 : i32
    return %arg1, %arg0 : i32, i32
  }
}

</mosaic_0001>

<llo_original>
// kernel: tpu_custom_call.1
$region0: #{tpu_custom_call.1}
  #allocation0 [shape = 'u32[]', space=smem, size = 0x4, offset = 0x4, fixed_abs, tag = 'smem constant byte address 0x4 - core index']
  #allocation1 [shape = 'u32[144,128]{1,0:T(1,128)}', space=vmem, size = 0x12000, scoped, tag = 'internal scratch']
  #allocation2 [shape = 'f32[16,256]{1,0:T(8,128)}', space=vmem, size = 0x4000, scoped, tag = 'scratch operand']
  %s0 = inlined_call_operand.vmem [shape: bf16[16,32], index: 0, kind: input, shape index: {}]
  %s1 = inlined_call_operand.vmem [shape: bf16[256,32], index: 1, kind: input, shape index: {}]
  %s2 = inlined_call_operand.hbm [shape: f32[16,256], index: 2, kind: output, shape index: {}]
  %s3 = sld [smem:[#allocation0]]
  $region30: #{tpu_custom_call.1} parent=0
    _
  %s5 = ssub.s32 1, %s3
  %s6 = scalar_select 0, %s5, %s3
  $region1: #{tpu_custom_call.1} parent=0
    #allocation3 [shape = 'u8[16384]{0}', space=vmem, size = 0x4000, scoped, tag = 'output window, operand 0, single buffered']
    #allocation4 [shape = 's32[1]{0}', space=sflag, size = 0x4, scoped, tag = 'scoped memory for tpu_custom_call.1']
    %7 = vsyncpa [#allocation4], 0
    // Predicated region
    $region2: #{tpu_custom_call.1} parent=1 // pred_check
      _
    $region3: #{tpu_custom_call.1} parent=1 // pred_check_branch
      %9 = sbr.rel (0) target = $region5
    $region4: #{tpu_custom_call.1} parent=1 // pred_region
      _
    $region5: #{tpu_custom_call.1} parent=1 // pred_fallthru
      _
    // Predicated region
    $region6: #{tpu_custom_call.1} parent=1 // pred_check
      _
    $region7: #{tpu_custom_call.1} parent=1 // pred_check_branch
      %11 = sbr.rel (0) target = $region9
    $region8: #{tpu_custom_call.1} parent=1 // pred_region
      _
    $region9: #{tpu_custom_call.1} parent=1 // pred_fallthru
      _
    %v13 = vld [vmem:[%s0] sm:$0xf]
    %v14 = vld [vmem:[%s0 + $0x4] sm:$0xf]
    %v15 = vld [vmem:[%s1] sm:$0xf]
    %v16 = vld [vmem:[%s1 + $0x4] sm:$0xf]
    %v17 = vld [vmem:[%s1 + $0x8] sm:$0xf]
    %v18 = vld [vmem:[%s1 + $0xc] sm:$0xf]
    %v19 = vld [vmem:[%s1 + $0x10] sm:$0xf]
    %v20 = vld [vmem:[%s1 + $0x14] sm:$0xf]
    %v21 = vld [vmem:[%s1 + $0x18] sm:$0xf]
    %v22 = vld [vmem:[%s1 + $0x1c] sm:$0xf]
    %v23 = vld [vmem:[%s1 + $0x20] sm:$0xf]
    %v24 = vld [vmem:[%s1 + $0x24] sm:$0xf]
    %v25 = vld [vmem:[%s1 + $0x28] sm:$0xf]
    %v26 = vld [vmem:[%s1 + $0x2c] sm:$0xf]
    %v27 = vld [vmem:[%s1 + $0x30] sm:$0xf]
    %v28 = vld [vmem:[%s1 + $0x34] sm:$0xf]
    %v29 = vld [vmem:[%s1 + $0x38] sm:$0xf]
    %v30 = vld [vmem:[%s1 + $0x3c] sm:$0xf]
    %v31 = vld [vmem:[%s1 + $0x40] sm:$0xf]
    %v32 = vld [vmem:[%s1 + $0x44] sm:$0xf]
    %v33 = vld [vmem:[%s1 + $0x48] sm:$0xf]
    %v34 = vld [vmem:[%s1 + $0x4c] sm:$0xf]
    %v35 = vld [vmem:[%s1 + $0x50] sm:$0xf]
    %v36 = vld [vmem:[%s1 + $0x54] sm:$0xf]
    %v37 = vld [vmem:[%s1 + $0x58] sm:$0xf]
    %v38 = vld [vmem:[%s1 + $0x5c] sm:$0xf]
    %v39 = vld [vmem:[%s1 + $0x60] sm:$0xf]
    %v40 = vld [vmem:[%s1 + $0x64] sm:$0xf]
    %v41 = vld [vmem:[%s1 + $0x68] sm:$0xf]
    %v42 = vld [vmem:[%s1 + $0x6c] sm:$0xf]
    %v43 = vld [vmem:[%s1 + $0x70] sm:$0xf]
    %v44 = vld [vmem:[%s1 + $0x74] sm:$0xf]
    %v45 = vld [vmem:[%s1 + $0x78] sm:$0xf]
    %v46 = vld [vmem:[%s1 + $0x7c] sm:$0xf]
    %v49 = vunpack.c.l.b16 %v13
    %v50 = vunpack.c.l.b16 %v14
    %v51 = vpack.c.b16 %v50, %v49
    %v84 = vunpack.c.l.b16 %v15
    %v85 = vunpack.c.l.b16 %v16
    %v86 = vunpack.c.l.b16 %v17
    %v87 = vunpack.c.l.b16 %v18
    %v88 = vunpack.c.l.b16 %v19
    %v89 = vunpack.c.l.b16 %v20
    %v90 = vunpack.c.l.b16 %v21
    %v91 = vunpack.c.l.b16 %v22
    %v92 = vunpack.c.l.b16 %v23
    %v93 = vunpack.c.l.b16 %v24
    %v94 = vunpack.c.l.b16 %v25
    %v95 = vunpack.c.l.b16 %v26
    %v96 = vunpack.c.l.b16 %v27
    %v97 = vunpack.c.l.b16 %v28
    %v98 = vunpack.c.l.b16 %v29
    %v99 = vunpack.c.l.b16 %v30
    %v100 = vunpack.c.l.b16 %v31
    %v101 = vunpack.c.l.b16 %v32
    %v102 = vunpack.c.l.b16 %v33
    %v103 = vunpack.c.l.b16 %v34
    %v104 = vunpack.c.l.b16 %v35
    %v105 = vunpack.c.l.b16 %v36
    %v106 = vunpack.c.l.b16 %v37
    %v107 = vunpack.c.l.b16 %v38
    %v108 = vunpack.c.l.b16 %v39
    %v109 = vunpack.c.l.b16 %v40
    %v110 = vunpack.c.l.b16 %v41
    %v111 = vunpack.c.l.b16 %v42
    %v112 = vunpack.c.l.b16 %v43
    %v113 = vunpack.c.l.b16 %v44
    %v114 = vunpack.c.l.b16 %v45
    %v115 = vunpack.c.l.b16 %v46
    %v116 = vpack.c.b16 %v85, %v84
    %v117 = vpack.c.b16 %v87, %v86
    %v118 = vpack.c.b16 %v89, %v88
    %v119 = vpack.c.b16 %v91, %v90
    %v120 = vpack.c.b16 %v93, %v92
    %v121 = vpack.c.b16 %v95, %v94
    %v122 = vpack.c.b16 %v97, %v96
    %v123 = vpack.c.b16 %v99, %v98
    %v124 = vpack.c.b16 %v101, %v100
    %v125 = vpack.c.b16 %v103, %v102
    %v126 = vpack.c.b16 %v105, %v104
    %v127 = vpack.c.b16 %v107, %v106
    %v128 = vpack.c.b16 %v109, %v108
    %v129 = vpack.c.b16 %v111, %v110
    %v130 = vpack.c.b16 %v113, %v112
    %v131 = vpack.c.b16 %v115, %v114
    %vm132 = vcmask 261120
    %v134 = vsel %vm132, %v51, 0
    %v137 = vsel %vm132, %v116, 0
    %v140 = vsel %vm132, %v117, 0
    %v143 = vsel %vm132, %v118, 0
    %v146 = vsel %vm132, %v119, 0
    %v149 = vsel %vm132, %v120, 0
    %v152 = vsel %vm132, %v121, 0
    %v155 = vsel %vm132, %v122, 0
    %v158 = vsel %vm132, %v123, 0
    %v161 = vsel %vm132, %v124, 0
    %v164 = vsel %vm132, %v125, 0
    %v167 = vsel %vm132, %v126, 0
    %v170 = vsel %vm132, %v127, 0
    %v173 = vsel %vm132, %v128, 0
    %v176 = vsel %vm132, %v129, 0
    %v179 = vsel %vm132, %v130, 0
    %v182 = vsel %vm132, %v131, 0
    %184 = vmatprep.subr.bf16.mxu0 0
    %185 = vmatpush1.bf16.xpose.msra.mxu0 %v158
    %186 = vmatprep.subr.bf16.mxu0 0
    %187 = vmatpush1.bf16.xpose.msra.mxu0 %v155
    %188 = vmatprep.subr.bf16.mxu0 0
    %189 = vmatpush1.bf16.xpose.msra.mxu0 %v152
    %190 = vmatprep.subr.bf16.mxu0 0
    %191 = vmatpush1.bf16.xpose.msra.mxu0 %v149
    %192 = vmatprep.subr.bf16.mxu0 0
    %193 = vmatpush1.bf16.xpose.msra.mxu0 %v146
    %194 = vmatprep.subr.bf16.mxu0 0
    %195 = vmatpush1.bf16.xpose.msra.mxu0 %v143
    %196 = vmatprep.subr.bf16.mxu0 0
    %197 = vmatpush1.bf16.xpose.msra.mxu0 %v140
    %198 = vmatprep.subr.bf16.mxu0 0
    %199 = vmatpush1.bf16.xpose.msra.mxu0 %v137
    %200 = vmatprep.subr.bf16.mxu0 0
    %201 = vmatpush2.bf16.xpose.msra.mxu0 %v182
    %202 = vmatprep.subr.bf16.mxu0 0
    %203 = vmatpush2.bf16.xpose.msra.mxu0 %v179
    %204 = vmatprep.subr.bf16.mxu0 0
    %205 = vmatpush2.bf16.xpose.msra.mxu0 %v176
    %206 = vmatprep.subr.bf16.mxu0 0
    %207 = vmatpush2.bf16.xpose.msra.mxu0 %v173
    %208 = vmatprep.subr.bf16.mxu0 0
    %209 = vmatpush2.bf16.xpose.msra.mxu0 %v170
    %210 = vmatprep.subr.bf16.mxu0 0
    %211 = vmatpush2.bf16.xpose.msra.mxu0 %v167
    %212 = vmatprep.subr.bf16.mxu0 0
    %213 = vmatpush2.bf16.xpose.msra.mxu0 %v164
    %214 = vmatprep.subr.bf16.mxu0 0
    %215 = vmatpush2.bf16.xpose.msra.mxu0 %v161
    %216 = vmatprep.mubr.bf16.mxu0 0
    %217 = vmatmul.mubr.bf16.gmra.mxu0 %v134
    %v218 = vpop.f32.mrf.mxu0
    %v219 = vadd.f32 0.0, %v218
    %v220 = vpop.f32.mrf.mxu0
    %v221 = vadd.f32 0.0, %v220
    %v222 = vpop.f32.mrf.mxu0
    %v223 = vadd.f32 0.0, %v222
    %v224 = vpop.f32.mrf.mxu0
    %v225 = vadd.f32 0.0, %v224
    %226 = vdwg.mxu0
    %p227 = scmp.eq.s32.totalorder 0, 0
    // Predicated region
    $region10: #{tpu_custom_call.1} parent=1 // pred_check
      %p228 = pneg %p227
    $region11: #{tpu_custom_call.1} parent=1 // pred_check_branch
      %230 = sbr.rel (%p228) target = $region13
    $region12: #{tpu_custom_call.1} parent=1 // pred_region
      %231 = vst [vmem:[#allocation2] sm:$0xff] %v219
      %232 = vst [vmem:[#allocation2 + $0x8] sm:$0xff] %v221
      %233 = vst [vmem:[#allocation2 + $0x10] sm:$0xff] %v223
      %234 = vst [vmem:[#allocation2 + $0x18] sm:$0xff] %v225
    $region13: #{tpu_custom_call.1} parent=1 // pred_fallthru
      _
    %p235 = scmp.gt.s32.totalorder 0, 0
    // Predicated region
    $region14: #{tpu_custom_call.1} parent=1 // pred_check
      %p236 = pneg %p235
    $region15: #{tpu_custom_call.1} parent=1 // pred_check_branch
      %238 = sbr.rel (%p236) target = $region17
    $region16: #{tpu_custom_call.1} parent=1 // pred_region
      %v239 = vld [vmem:[#allocation2] sm:$0xff]
      %v240 = vld [vmem:[#allocation2 + $0x8] sm:$0xff]
      %v241 = vld [vmem:[#allocation2 + $0x10] sm:$0xff]
      %v242 = vld [vmem:[#allocation2 + $0x18] sm:$0xff]
      %v243 = vadd.f32 %v239, %v219
      %v244 = vadd.f32 %v240, %v221
      %v245 = vadd.f32 %v241, %v223
      %v246 = vadd.f32 %v242, %v225
      %247 = vst [vmem:[#allocation2] sm:$0xff] %v243
      %248 = vst [vmem:[#allocation2 + $0x8] sm:$0xff] %v244
      %249 = vst [vmem:[#allocation2 + $0x10] sm:$0xff] %v245
      %250 = vst [vmem:[#allocation2 + $0x18] sm:$0xff] %v246
    $region17: #{tpu_custom_call.1} parent=1 // pred_fallthru
      _
    // Predicated region
    $region18: #{tpu_custom_call.1} parent=1 // pred_check
      %p251 = pneg %p227
    $region19: #{tpu_custom_call.1} parent=1 // pred_check_branch
      %253 = sbr.rel (%p251) target = $region21
    $region20: #{tpu_custom_call.1} parent=1 // pred_region
      %v254 = vld [vmem:[#allocation2] sm:$0xff]
      %v255 = vld [vmem:[#allocation2 + $0x8] sm:$0xff]
      %v256 = vld [vmem:[#allocation2 + $0x10] sm:$0xff]
      %v257 = vld [vmem:[#allocation2 + $0x18] sm:$0xff]
      %258 = vst [vmem:[#allocation3] sm:$0xff] %v254
      %259 = vst [vmem:[#allocation3 + $0x8] sm:$0xff] %v255
      %260 = vst [vmem:[#allocation3 + $0x10] sm:$0xff] %v256
      %261 = vst [vmem:[#allocation3 + $0x18] sm:$0xff] %v257
    $region21: #{tpu_custom_call.1} parent=1 // pred_fallthru
      _
    // Predicated region
    $region22: #{tpu_custom_call.1} parent=1 // pred_check
      _
    $region23: #{tpu_custom_call.1} parent=1 // pred_check_branch
      %263 = sbr.rel (0) target = $region25
    $region24: #{tpu_custom_call.1} parent=1 // pred_region
      %s265 = ssub.s32 512, 512
      %266 = vsyncadd [#allocation4], %s265
      %s267 = sshll.u32 [#allocation3], 4
      %s268 = int_to_ptr.vmem [resolvable:$true] %s267
      %273 = dma.vmem_to_hbm [thread:$0]  %s268, 512, %s2, [#allocation4], 256, 256, 16
    $region25: #{tpu_custom_call.1} parent=1 // pred_fallthru
      _
    // Predicated region
    $region26: #{tpu_custom_call.1} parent=1 // pred_check
      _
    $region27: #{tpu_custom_call.1} parent=1 // pred_check_branch
      %275 = sbr.rel (0) target = $region29
    $region28: #{tpu_custom_call.1} parent=1 // pred_region
      %276 = dma.done [#allocation4], 512
    $region29: #{tpu_custom_call.1} parent=1 // pred_fallthru
      _
    %277 = vsyncpa [#allocation4], 1

</llo_original>
